<compile_context>
chip_gen: v7x
topology: tpu7x:2x2x1
jax: 0.10.0
libtpu: 0.0.40
codegen_flags: <defaults>
</compile_context>

<pallas_src>
import jax
import jax.numpy as jnp
from jax.experimental import pallas as pl
from jax.experimental.pallas import tpu as pltpu


def _round_up(x, m):
    return (x + m - 1) // m * m


def reward_prior_kernel(z_ref, a_ref, w1z_ref, w1a_ref, b1_ref, g_ref, bt_ref,
                        w2_ref, b2_ref, w3_ref, b3_ref, o_ref):
    """Fused MLP in feature-major layout: activations are [feat, TB] tiles."""
    z = z_ref[...]                                            # [L, TB]
    a = a_ref[...]                                            # [A, TB]

    # --- Linear 1 with the concat folded in: h = W1z^T @ z + W1a^T @ a + b1 ---
    h = jnp.dot(w1z_ref[...], z, preferred_element_type=jnp.float32)   # [H, TB]
    h = h + jnp.dot(w1a_ref[...], a, preferred_element_type=jnp.float32)
    h = h + b1_ref[...]                                       # (H,1) bcast over lanes

    # --- LayerNorm over the feature (sublane) axis, eps=1e-5, true-H stats ---
    inv_h = 1.0 / h.shape[0]
    mu = jnp.sum(h, axis=0, keepdims=True) * inv_h            # [1, TB]
    d = h - mu
    var = jnp.sum(d * d, axis=0, keepdims=True) * inv_h       # [1, TB]
    h = d * jax.lax.rsqrt(var + 1e-5)
    h = h * g_ref[...] + bt_ref[...]

    # --- Tanh (EUP) ---
    h = jnp.tanh(h)

    # --- Linear 2: h = W2^T @ h + b2 ---
    h = jnp.dot(w2_ref[...], h, preferred_element_type=jnp.float32)    # [H, TB]
    h = h + b2_ref[...]

    # --- ELU (alpha = 1.0); exp arg clamped so the discarded branch can't overflow ---
    h = jnp.where(h > 0, h, jnp.exp(jnp.minimum(h, 0.0)) - 1.0)

    # --- Linear 3 (H -> 1): lane-dense (1, TB) output row ---
    r = jnp.dot(w3_ref[...], h, preferred_element_type=jnp.float32)    # [1, TB]
    o_ref[...] = (r + b3_ref[0, 0]).astype(o_ref.dtype)


def reward_prior_forward(z, a, params, *, tb_max=4096):
    """z: [B, latent], a: [B, action] -> reward: [B, 1]."""
    B, L = z.shape
    A = a.shape[1]
    H = params["w1zT"].shape[0]

    # Batch tile: multiple of 128 (lanes), large to amortize per-step overhead,
    # but keep >= 2 grid steps when possible so both v7x TensorCores get work.
    B128 = _round_up(max(B, 1), 128)
    TB = min(tb_max, B128)
    if B128 >= 256 and B128 // TB < 2:
        TB = _round_up((B128 + 1) // 2, 128)
    B_pad = _round_up(B, TB)
    grid = (B_pad // TB,)

    # Feature-major: batch goes on the lane axis.
    zT = jnp.pad(z.T, ((0, 0), (0, B_pad - B)))               # [L, B_pad]
    aT = jnp.pad(a.T, ((0, 0), (0, B_pad - B)))               # [A, B_pad]

    def resident(shape):
        # Weights / biases: constant block index -> fetched once, stay in VMEM.
        return pl.BlockSpec(shape, lambda i: (0, 0))

    out = pl.pallas_call(
        reward_prior_kernel,
        out_shape=jax.ShapeDtypeStruct((1, B_pad), z.dtype),
        grid=grid,
        in_specs=[
            pl.BlockSpec((L, TB), lambda i: (0, i)),   # zT (streamed)
            pl.BlockSpec((A, TB), lambda i: (0, i)),   # aT (streamed)
            resident((H, L)),                          # w1zT
            resident((H, A)),                          # w1aT
            resident((H, 1)),                          # b1
            resident((H, 1)),                          # gamma
            resident((H, 1)),                          # beta
            resident((H, H)),                          # w2T
            resident((H, 1)),                          # b2
            resident((1, H)),                          # w3 (row layout)
            pl.BlockSpec(memory_space=pltpu.MemorySpace.SMEM),  # b3 scalar
        ],
        out_specs=pl.BlockSpec((1, TB), lambda i: (0, i)),
        compiler_params=pltpu.CompilerParams(
            dimension_semantics=("parallel",),
            vmem_limit_bytes=32 * 1024 * 1024,
        ),
    )(zT, aT, params["w1zT"], params["w1aT"], params["b1"], params["gamma"],
      params["beta"], params["w2T"], params["b2"], params["w3"], params["b3"])

    return out[0, :B].reshape(B, 1)


def init_params(key, latent_dims, hidden_dims, action_dims):
    """Deterministic synthetic init (stand-in for utils.weight_init)."""
    d_in = latent_dims + action_dims
    ks = jax.random.split(key, 7)
    s1 = 1.0 / jnp.sqrt(d_in)
    s2 = 1.0 / jnp.sqrt(hidden_dims)
    w1 = jax.random.normal(ks[0], (d_in, hidden_dims), jnp.float32) * s1
    w2 = jax.random.normal(ks[4], (hidden_dims, hidden_dims), jnp.float32) * s2
    return {
        "w1zT": w1[:latent_dims].T,                                            # [H, L]
        "w1aT": w1[latent_dims:].T,                                            # [H, A]
        "b1": 0.1 * jax.random.normal(ks[1], (hidden_dims, 1), jnp.float32),
        "gamma": 1.0 + 0.1 * jax.random.normal(ks[2], (hidden_dims, 1), jnp.float32),
        "beta": 0.1 * jax.random.normal(ks[3], (hidden_dims, 1), jnp.float32),
        "w2T": w2.T,                                                           # [H, H]
        "b2": 0.1 * jax.random.normal(ks[5], (hidden_dims, 1), jnp.float32),
        "w3": jax.random.normal(ks[6], (1, hidden_dims), jnp.float32) * s2,    # row layout
        "b3": jnp.full((1, 1), 0.05, jnp.float32),
    }


def reference_forward(z, a, p):
    """Pure-JAX reference of the PyTorch forward, for a correctness check."""
    x = jnp.concatenate([z, a], axis=-1)
    w1 = jnp.concatenate([p["w1zT"], p["w1aT"]], axis=1).T     # [L+A, H]
    h = x @ w1 + p["b1"].T
    mu = jnp.mean(h, axis=-1, keepdims=True)
    var = jnp.mean((h - mu) ** 2, axis=-1, keepdims=True)
    h = (h - mu) / jnp.sqrt(var + 1e-5) * p["gamma"].T + p["beta"].T
    h = jnp.tanh(h)
    h = h @ p["w2T"].T + p["b2"].T
    h = jnp.where(h > 0, h, jnp.exp(h) - 1.0)
    return h @ p["w3"].T + p["b3"]


if __name__ == "__main__":
    latent_dims, hidden_dims, action_dims = 32, 32, 8
    batch = 8

    key = jax.random.PRNGKey(0)
    kz, ka, kp = jax.random.split(key, 3)
    z = jax.random.normal(kz, (batch, latent_dims), jnp.float32)
    a = jax.random.normal(ka, (batch, action_dims), jnp.float32)
    params = init_params(kp, latent_dims, hidden_dims, action_dims)

    out = reward_prior_forward(z, a, params)
    out = jax.block_until_ready(out)

    ref = reference_forward(z, a, params)
    assert out.shape == (batch, 1)
    assert jnp.allclose(out, ref, atol=1e-4, rtol=1e-4)

    print("KERNEL_OK")
</pallas_src>

<mosaic_0001>
module attributes {stable_mosaic.version = 11 : i64} {
  func.func @reward_prior_kernel(%arg0: i32, %arg1: memref<32x128xf32, #tpu.memory_space<vmem>>, %arg2: memref<8x128xf32, #tpu.memory_space<vmem>>, %arg3: memref<32x32xf32, #tpu.memory_space<vmem>>, %arg4: memref<32x8xf32, #tpu.memory_space<vmem>>, %arg5: memref<32x1xf32, #tpu.memory_space<vmem>>, %arg6: memref<32x1xf32, #tpu.memory_space<vmem>>, %arg7: memref<32x1xf32, #tpu.memory_space<vmem>>, %arg8: memref<32x32xf32, #tpu.memory_space<vmem>>, %arg9: memref<32x1xf32, #tpu.memory_space<vmem>>, %arg10: memref<1x32xf32, #tpu.memory_space<vmem>>, %arg11: memref<1x1xf32, #tpu.memory_space<smem>>, %arg12: memref<1x128xf32, #tpu.memory_space<vmem>>) attributes {dimension_semantics = [#tpu.dimension_semantics<parallel>], iteration_bounds = array<i64: 1>, scalar_prefetch = 0 : i64, scratch_operands = 0 : i64, tpu.core_type = #tpu.core_type<tc>, window_params = [{transform_indices = @transform_0, window_bounds = array<i64: 32, 128>}, {transform_indices = @transform_1, window_bounds = array<i64: 8, 128>}, {pipeline_mode = #tpu.pipeline_mode<synchronous>, transform_indices = @transform_2, window_bounds = array<i64: 32, 32>}, {pipeline_mode = #tpu.pipeline_mode<synchronous>, transform_indices = @transform_3, window_bounds = array<i64: 32, 8>}, {pipeline_mode = #tpu.pipeline_mode<synchronous>, transform_indices = @transform_4, window_bounds = array<i64: 32, 1>}, {pipeline_mode = #tpu.pipeline_mode<synchronous>, transform_indices = @transform_5, window_bounds = array<i64: 32, 1>}, {pipeline_mode = #tpu.pipeline_mode<synchronous>, transform_indices = @transform_6, window_bounds = array<i64: 32, 1>}, {pipeline_mode = #tpu.pipeline_mode<synchronous>, transform_indices = @transform_7, window_bounds = array<i64: 32, 32>}, {pipeline_mode = #tpu.pipeline_mode<synchronous>, transform_indices = @transform_8, window_bounds = array<i64: 32, 1>}, {pipeline_mode = #tpu.pipeline_mode<synchronous>, transform_indices = @transform_9, window_bounds = array<i64: 1, 32>}, {transform_indices = @transform_10, window_bounds = array<i64: 1, 1>}, {transform_indices = @transform_11, window_bounds = array<i64: 1, 128>}]} {
    %c0 = arith.constant 0 : index
    %c0_0 = arith.constant 0 : index
    %0 = vector.load %arg1[%c0, %c0_0] : memref<32x128xf32, #tpu.memory_space<vmem>>, vector<32x128xf32>
    %c0_1 = arith.constant 0 : index
    %c0_2 = arith.constant 0 : index
    %1 = vector.load %arg2[%c0_1, %c0_2] : memref<8x128xf32, #tpu.memory_space<vmem>>, vector<8x128xf32>
    %c0_3 = arith.constant 0 : index
    %c0_4 = arith.constant 0 : index
    %2 = vector.load %arg3[%c0_3, %c0_4] : memref<32x32xf32, #tpu.memory_space<vmem>>, vector<32x32xf32>
    %cst = arith.constant dense<0.000000e+00> : vector<32x128xf32>
    %3 = tpu.matmul %2, %0, %cst {dimension_numbers = #tpu.dot_dimension_numbers<[1], [0], [0], [1], [0, 0, 1, 1], [], []>} : vector<32x32xf32>, vector<32x128xf32>, vector<32x128xf32> -> vector<32x128xf32>
    %c0_5 = arith.constant 0 : index
    %c0_6 = arith.constant 0 : index
    %4 = vector.load %arg4[%c0_5, %c0_6] : memref<32x8xf32, #tpu.memory_space<vmem>>, vector<32x8xf32>
    %cst_7 = arith.constant dense<0.000000e+00> : vector<32x128xf32>
    %5 = tpu.matmul %4, %1, %cst_7 {dimension_numbers = #tpu.dot_dimension_numbers<[1], [0], [0], [1], [0, 0, 1, 1], [], []>} : vector<32x8xf32>, vector<8x128xf32>, vector<32x128xf32> -> vector<32x128xf32>
    %6 = arith.addf %3, %5 : vector<32x128xf32>
    %c0_8 = arith.constant 0 : index
    %c0_9 = arith.constant 0 : index
    %7 = vector.load %arg5[%c0_8, %c0_9] : memref<32x1xf32, #tpu.memory_space<vmem>>, vector<32x1xf32>
    %8 = vector.broadcast %7 : vector<32x1xf32> to vector<32x128xf32>
    %9 = arith.addf %6, %8 : vector<32x128xf32>
    %cst_10 = arith.constant dense<0.000000e+00> : vector<128xf32>
    %10 = vector.multi_reduction <add>, %9, %cst_10 [0] : vector<32x128xf32> to vector<128xf32>
    %11 = vector.shape_cast %10 : vector<128xf32> to vector<1x128xf32>
    %cst_11 = arith.constant 3.125000e-02 : f32
    %12 = vector.broadcast %cst_11 : f32 to vector<1x128xf32>
    %13 = arith.mulf %11, %12 : vector<1x128xf32>
    %14 = vector.broadcast %13 : vector<1x128xf32> to vector<32x128xf32>
    %15 = arith.subf %9, %14 : vector<32x128xf32>
    %16 = arith.mulf %15, %15 : vector<32x128xf32>
    %cst_12 = arith.constant dense<0.000000e+00> : vector<128xf32>
    %17 = vector.multi_reduction <add>, %16, %cst_12 [0] : vector<32x128xf32> to vector<128xf32>
    %18 = vector.shape_cast %17 : vector<128xf32> to vector<1x128xf32>
    %cst_13 = arith.constant 3.125000e-02 : f32
    %19 = vector.broadcast %cst_13 : f32 to vector<1x128xf32>
    %20 = arith.mulf %18, %19 : vector<1x128xf32>
    %cst_14 = arith.constant 9.99999974E-6 : f32
    %21 = vector.broadcast %cst_14 : f32 to vector<1x128xf32>
    %22 = arith.addf %20, %21 : vector<1x128xf32>
    %23 = math.rsqrt %22 : vector<1x128xf32>
    %24 = vector.broadcast %23 : vector<1x128xf32> to vector<32x128xf32>
    %25 = arith.mulf %15, %24 : vector<32x128xf32>
    %c0_15 = arith.constant 0 : index
    %c0_16 = arith.constant 0 : index
    %26 = vector.load %arg6[%c0_15, %c0_16] : memref<32x1xf32, #tpu.memory_space<vmem>>, vector<32x1xf32>
    %27 = vector.broadcast %26 : vector<32x1xf32> to vector<32x128xf32>
    %28 = arith.mulf %25, %27 : vector<32x128xf32>
    %c0_17 = arith.constant 0 : index
    %c0_18 = arith.constant 0 : index
    %29 = vector.load %arg7[%c0_17, %c0_18] : memref<32x1xf32, #tpu.memory_space<vmem>>, vector<32x1xf32>
    %30 = vector.broadcast %29 : vector<32x1xf32> to vector<32x128xf32>
    %31 = arith.addf %28, %30 : vector<32x128xf32>
    %32 = math.tanh %31 : vector<32x128xf32>
    %c0_19 = arith.constant 0 : index
    %c0_20 = arith.constant 0 : index
    %33 = vector.load %arg8[%c0_19, %c0_20] : memref<32x32xf32, #tpu.memory_space<vmem>>, vector<32x32xf32>
    %cst_21 = arith.constant dense<0.000000e+00> : vector<32x128xf32>
    %34 = tpu.matmul %33, %32, %cst_21 {dimension_numbers = #tpu.dot_dimension_numbers<[1], [0], [0], [1], [0, 0, 1, 1], [], []>} : vector<32x32xf32>, vector<32x128xf32>, vector<32x128xf32> -> vector<32x128xf32>
    %c0_22 = arith.constant 0 : index
    %c0_23 = arith.constant 0 : index
    %35 = vector.load %arg9[%c0_22, %c0_23] : memref<32x1xf32, #tpu.memory_space<vmem>>, vector<32x1xf32>
    %36 = vector.broadcast %35 : vector<32x1xf32> to vector<32x128xf32>
    %37 = arith.addf %34, %36 : vector<32x128xf32>
    %cst_24 = arith.constant 0.000000e+00 : f32
    %38 = vector.broadcast %cst_24 : f32 to vector<32x128xf32>
    %39 = arith.cmpf ogt, %37, %38 : vector<32x128xf32>
    %cst_25 = arith.constant 0.000000e+00 : f32
    %40 = vector.broadcast %cst_25 : f32 to vector<32x128xf32>
    %41 = arith.minimumf %37, %40 : vector<32x128xf32>
    %42 = math.exp %41 : vector<32x128xf32>
    %cst_26 = arith.constant 1.000000e+00 : f32
    %43 = vector.broadcast %cst_26 : f32 to vector<32x128xf32>
    %44 = arith.subf %42, %43 : vector<32x128xf32>
    %45 = arith.select %39, %37, %44 : vector<32x128xi1>, vector<32x128xf32>
    %c0_27 = arith.constant 0 : index
    %c0_28 = arith.constant 0 : index
    %46 = vector.load %arg10[%c0_27, %c0_28] : memref<1x32xf32, #tpu.memory_space<vmem>>, vector<1x32xf32>
    %cst_29 = arith.constant dense<0.000000e+00> : vector<1x128xf32>
    %47 = tpu.matmul %46, %45, %cst_29 {dimension_numbers = #tpu.dot_dimension_numbers<[1], [0], [0], [1], [0, 0, 1, 1], [], []>} : vector<1x32xf32>, vector<32x128xf32>, vector<1x128xf32> -> vector<1x128xf32>
    %c0_30 = arith.constant 0 : index
    %c0_31 = arith.constant 0 : index
    %48 = memref.load %arg11[%c0_30, %c0_31] : memref<1x1xf32, #tpu.memory_space<smem>>
    %49 = vector.broadcast %48 : f32 to vector<1x128xf32>
    %50 = arith.addf %47, %49 : vector<1x128xf32>
    %c0_32 = arith.constant 0 : index
    %c0_33 = arith.constant 0 : index
    %51 = vector.load %arg12[%c0_32, %c0_33] : memref<1x128xf32, #tpu.memory_space<vmem>>, vector<1x128xf32>
    tpu.vector_store %arg12[%c0_32, %c0_33], %50 {strides = array<i32>} : memref<1x128xf32, #tpu.memory_space<vmem>>, vector<1x128xf32>,
    return
  }
  func.func @transform_0(%arg0: i32) -> (i32, i32) {
    %c0_i32 = arith.constant 0 : i32
    %c0_i32_0 = arith.constant 0 : i32
    return %c0_i32, %arg0 : i32, i32
  }
  func.func @transform_1(%arg0: i32) -> (i32, i32) {
    %c0_i32 = arith.constant 0 : i32
    %c0_i32_0 = arith.constant 0 : i32
    return %c0_i32, %arg0 : i32, i32
  }
  func.func @transform_2(%arg0: i32) -> (i32, i32) {
    %c0_i32 = arith.constant 0 : i32
    %c0_i32_0 = arith.constant 0 : i32
    %c0_i32_1 = arith.constant 0 : i32
    return %c0_i32, %c0_i32_0 : i32, i32
  }
  func.func @transform_3(%arg0: i32) -> (i32, i32) {
    %c0_i32 = arith.constant 0 : i32
    %c0_i32_0 = arith.constant 0 : i32
    %c0_i32_1 = arith.constant 0 : i32
    return %c0_i32, %c0_i32_0 : i32, i32
  }
  func.func @transform_4(%arg0: i32) -> (i32, i32) {
    %c0_i32 = arith.constant 0 : i32
    %c0_i32_0 = arith.constant 0 : i32
    %c0_i32_1 = arith.constant 0 : i32
    return %c0_i32, %c0_i32_0 : i32, i32
  }
  func.func @transform_5(%arg0: i32) -> (i32, i32) {
    %c0_i32 = arith.constant 0 : i32
    %c0_i32_0 = arith.constant 0 : i32
    %c0_i32_1 = arith.constant 0 : i32
    return %c0_i32, %c0_i32_0 : i32, i32
  }
  func.func @transform_6(%arg0: i32) -> (i32, i32) {
    %c0_i32 = arith.constant 0 : i32
    %c0_i32_0 = arith.constant 0 : i32
    %c0_i32_1 = arith.constant 0 : i32
    return %c0_i32, %c0_i32_0 : i32, i32
  }
  func.func @transform_7(%arg0: i32) -> (i32, i32) {
    %c0_i32 = arith.constant 0 : i32
    %c0_i32_0 = arith.constant 0 : i32
    %c0_i32_1 = arith.constant 0 : i32
    return %c0_i32, %c0_i32_0 : i32, i32
  }
  func.func @transform_8(%arg0: i32) -> (i32, i32) {
    %c0_i32 = arith.constant 0 : i32
    %c0_i32_0 = arith.constant 0 : i32
    %c0_i32_1 = arith.constant 0 : i32
    return %c0_i32, %c0_i32_0 : i32, i32
  }
  func.func @transform_9(%arg0: i32) -> (i32, i32) {
    %c0_i32 = arith.constant 0 : i32
    %c0_i32_0 = arith.constant 0 : i32
    %c0_i32_1 = arith.constant 0 : i32
    return %c0_i32, %c0_i32_0 : i32, i32
  }
  func.func @transform_10(%arg0: i32) -> (i32, i32) {
    %c0_i32 = arith.constant 0 : i32
    %c0_i32_0 = arith.constant 0 : i32
    %c0_i32_1 = arith.constant 0 : i32
    return %c0_i32, %c0_i32_0 : i32, i32
  }
  func.func @transform_11(%arg0: i32) -> (i32, i32) {
    %c0_i32 = arith.constant 0 : i32
    %c0_i32_0 = arith.constant 0 : i32
    return %c0_i32, %arg0 : i32, i32
  }
}

</mosaic_0001>

<llo_original>
// kernel: tpu_custom_call.1
$region0: #{tpu_custom_call.1}
  #allocation0 [shape = 'u32[]', space=smem, size = 0x4, offset = 0x4, fixed_abs, tag = 'smem constant byte address 0x4 - core index']
  #allocation1 [shape = 'u32[144,128]{1,0:T(1,128)}', space=vmem, size = 0x12000, scoped, tag = 'internal scratch']
  #allocation2 [shape = 'f32[1,1]{1,0:T(1,128)S(6)}', space=smem, size = 0x200, scoped, tag = 'scoped memory for tpu_custom_call.1']
  %s0 = inlined_call_operand.vmem [shape: f32[32,128], index: 0, kind: input, shape index: {}]
  %s1 = inlined_call_operand.vmem [shape: f32[8,128], index: 1, kind: input, shape index: {}]
  %s2 = inlined_call_operand.vmem [shape: f32[32,32], index: 2, kind: input, shape index: {}]
  %s3 = inlined_call_operand.vmem [shape: f32[32,8], index: 3, kind: input, shape index: {}]
  %s4 = inlined_call_operand.vmem [shape: f32[32,1], index: 4, kind: input, shape index: {}]
  %s5 = inlined_call_operand.vmem [shape: f32[32,1], index: 5, kind: input, shape index: {}]
  %s6 = inlined_call_operand.vmem [shape: f32[32,1], index: 6, kind: input, shape index: {}]
  %s7 = inlined_call_operand.vmem [shape: f32[32,32], index: 7, kind: input, shape index: {}]
  %s8 = inlined_call_operand.vmem [shape: f32[32,1], index: 8, kind: input, shape index: {}]
  %s9 = inlined_call_operand.vmem [shape: f32[1,32], index: 9, kind: input, shape index: {}]
  %s10 = inlined_call_operand.<no memory space> [shape: f32[1,1], index: 10, kind: input, shape index: {}]
  %s11 = inlined_call_operand.hbm [shape: f32[1,128], index: 11, kind: output, shape index: {}]
  %s12 = sld [smem:[#allocation0]]
  $region54: #{tpu_custom_call.1} parent=0
    _
  %s14 = ssub.s32 1, %s12
  %s15 = scalar_select 0, %s14, %s12
  %16 = sst [smem:[#allocation2]] %s10
  $region1: #{tpu_custom_call.1} parent=0
    #allocation3 [shape = 'u8[512]{0}', space=vmem, size = 0x400, scoped, tag = 'output window, operand 0, single buffered']
    #allocation4 [shape = 's32[1]{0}', space=sflag, size = 0x4, scoped, tag = 'scoped memory for tpu_custom_call.1']
    %17 = vsyncpa [#allocation4], 0
    // Predicated region
    $region2: #{tpu_custom_call.1} parent=1 // pred_check
      _
    $region3: #{tpu_custom_call.1} parent=1 // pred_check_branch
      %19 = sbr.rel (0) target = $region5
    $region4: #{tpu_custom_call.1} parent=1 // pred_region
      _
    $region5: #{tpu_custom_call.1} parent=1 // pred_fallthru
      _
    // Predicated region
    $region6: #{tpu_custom_call.1} parent=1 // pred_check
      _
    $region7: #{tpu_custom_call.1} parent=1 // pred_check_branch
      %21 = sbr.rel (0) target = $region9
    $region8: #{tpu_custom_call.1} parent=1 // pred_region
      _
    $region9: #{tpu_custom_call.1} parent=1 // pred_fallthru
      _
    // Predicated region
    $region10: #{tpu_custom_call.1} parent=1 // pred_check
      _
    $region11: #{tpu_custom_call.1} parent=1 // pred_check_branch
      %23 = sbr.rel (0) target = $region13
    $region12: #{tpu_custom_call.1} parent=1 // pred_region
      _
    $region13: #{tpu_custom_call.1} parent=1 // pred_fallthru
      _
    // Predicated region
    $region14: #{tpu_custom_call.1} parent=1 // pred_check
      _
    $region15: #{tpu_custom_call.1} parent=1 // pred_check_branch
      %25 = sbr.rel (0) target = $region17
    $region16: #{tpu_custom_call.1} parent=1 // pred_region
      _
    $region17: #{tpu_custom_call.1} parent=1 // pred_fallthru
      _
    // Predicated region
    $region18: #{tpu_custom_call.1} parent=1 // pred_check
      _
    $region19: #{tpu_custom_call.1} parent=1 // pred_check_branch
      %27 = sbr.rel (0) target = $region21
    $region20: #{tpu_custom_call.1} parent=1 // pred_region
      _
    $region21: #{tpu_custom_call.1} parent=1 // pred_fallthru
      _
    // Predicated region
    $region22: #{tpu_custom_call.1} parent=1 // pred_check
      _
    $region23: #{tpu_custom_call.1} parent=1 // pred_check_branch
      %29 = sbr.rel (0) target = $region25
    $region24: #{tpu_custom_call.1} parent=1 // pred_region
      _
    $region25: #{tpu_custom_call.1} parent=1 // pred_fallthru
      _
    // Predicated region
    $region26: #{tpu_custom_call.1} parent=1 // pred_check
      _
    $region27: #{tpu_custom_call.1} parent=1 // pred_check_branch
      %31 = sbr.rel (0) target = $region29
    $region28: #{tpu_custom_call.1} parent=1 // pred_region
      _
    $region29: #{tpu_custom_call.1} parent=1 // pred_fallthru
      _
    // Predicated region
    $region30: #{tpu_custom_call.1} parent=1 // pred_check
      _
    $region31: #{tpu_custom_call.1} parent=1 // pred_check_branch
      %33 = sbr.rel (0) target = $region33
    $region32: #{tpu_custom_call.1} parent=1 // pred_region
      _
    $region33: #{tpu_custom_call.1} parent=1 // pred_fallthru
      _
    // Predicated region
    $region34: #{tpu_custom_call.1} parent=1 // pred_check
      _
    $region35: #{tpu_custom_call.1} parent=1 // pred_check_branch
      %35 = sbr.rel (0) target = $region37
    $region36: #{tpu_custom_call.1} parent=1 // pred_region
      _
    $region37: #{tpu_custom_call.1} parent=1 // pred_fallthru
      _
    // Predicated region
    $region38: #{tpu_custom_call.1} parent=1 // pred_check
      _
    $region39: #{tpu_custom_call.1} parent=1 // pred_check_branch
      %37 = sbr.rel (0) target = $region41
    $region40: #{tpu_custom_call.1} parent=1 // pred_region
      _
    $region41: #{tpu_custom_call.1} parent=1 // pred_fallthru
      _
    // Predicated region
    $region42: #{tpu_custom_call.1} parent=1 // pred_check
      _
    $region43: #{tpu_custom_call.1} parent=1 // pred_check_branch
      %39 = sbr.rel (0) target = $region45
    $region44: #{tpu_custom_call.1} parent=1 // pred_region
      _
    $region45: #{tpu_custom_call.1} parent=1 // pred_fallthru
      _
    %v40 = vld [vmem:[%s0] sm:$0xff]
    %v41 = vld [vmem:[%s0 + $0x8] sm:$0xff]
    %v42 = vld [vmem:[%s0 + $0x10] sm:$0xff]
    %v43 = vld [vmem:[%s0 + $0x18] sm:$0xff]
    %v44 = vld [vmem:[%s1] sm:$0xff]
    %v45 = vld [vmem:[%s2] sm:$0xff]
    %v46 = vld [vmem:[%s2 + $0x8] sm:$0xff]
    %v47 = vld [vmem:[%s2 + $0x10] sm:$0xff]
    %v48 = vld [vmem:[%s2 + $0x18] sm:$0xff]
    %v49 = vld [vmem:[%s3] sm:$0xff]
    %v50 = vld [vmem:[%s3 + $0x8] sm:$0xff]
    %v51 = vld [vmem:[%s3 + $0x10] sm:$0xff]
    %v52 = vld [vmem:[%s3 + $0x18] sm:$0xff]
    %vm53 = vcmask 64512
    %v55 = vsel %vm53, %v49, 0
    %v58 = vsel %vm53, %v50, 0
    %v61 = vsel %vm53, %v51, 0
    %v64 = vsel %vm53, %v52, 0
    %66 = vmatprep.subr.mxu0 0.0
    %67 = vmatpush1.msra.mxu0 %v44
    %68 = vmatprep.subr.mxu0 0.0
    %69 = vmatpush1.msra.mxu0 0.0
    %70 = vmatprep.subr.mxu0 0.0
    %71 = vmatpush1.msra.mxu0 0.0
    %72 = vmatprep.subr.mxu0 0.0
    %73 = vmatpush1.msra.mxu0 0.0
    %74 = vmatprep.subr.mxu0 0.0
    %75 = vmatpush1.msra.mxu0 0.0
    %76 = vmatprep.subr.mxu0 0.0
    %77 = vmatpush1.msra.mxu0 0.0
    %78 = vmatprep.subr.mxu0 0.0
    %79 = vmatpush1.msra.mxu0 0.0
    %80 = vmatprep.subr.mxu0 0.0
    %81 = vmatpush1.msra.mxu0 0.0
    %82 = vmatprep.subr.mxu0 0.0
    %83 = vmatpush1.msra.mxu0 0.0
    %84 = vmatprep.subr.mxu0 0.0
    %85 = vmatpush1.msra.mxu0 0.0
    %86 = vmatprep.subr.mxu0 0.0
    %87 = vmatpush1.msra.mxu0 0.0
    %88 = vmatprep.subr.mxu0 0.0
    %89 = vmatpush1.msra.mxu0 0.0
    %90 = vmatprep.subr.mxu0 0.0
    %91 = vmatpush1.msra.mxu0 0.0
    %92 = vmatprep.subr.mxu0 0.0
    %93 = vmatpush1.msra.mxu0 0.0
    %94 = vmatprep.subr.mxu0 0.0
    %95 = vmatpush1.msra.mxu0 0.0
    %96 = vmatprep.subr.mxu0 0.0
    %97 = vmatpush1.msra.mxu0 0.0
    %98 = vmatprep.subr.mxu0 0.0
    %99 = vmatpush1.msra.mxu0 0.0
    %100 = vmatprep.subr.mxu0 0.0
    %101 = vmatpush1.msra.mxu0 0.0
    %102 = vmatprep.subr.mxu0 0.0
    %103 = vmatpush1.msra.mxu0 0.0
    %104 = vmatprep.subr.mxu0 0.0
    %105 = vmatpush1.msra.mxu0 0.0
    %106 = vmatprep.subr.mxu0 0.0
    %107 = vmatpush1.msra.mxu0 0.0
    %108 = vmatprep.subr.mxu0 0.0
    %109 = vmatpush1.msra.mxu0 0.0
    %110 = vmatprep.subr.mxu0 0.0
    %111 = vmatpush1.msra.mxu0 0.0
    %112 = vmatprep.subr.mxu0 0.0
    %113 = vmatpush1.msra.mxu0 0.0
    %114 = vmatprep.subr.mxu0 0.0
    %115 = vmatpush1.msra.mxu0 0.0
    %116 = vmatprep.subr.mxu0 0.0
    %117 = vmatpush1.msra.mxu0 0.0
    %118 = vmatprep.subr.mxu0 0.0
    %119 = vmatpush1.msra.mxu0 0.0
    %120 = vmatprep.subr.mxu0 0.0
    %121 = vmatpush1.msra.mxu0 0.0
    %122 = vmatprep.subr.mxu0 0.0
    %123 = vmatpush1.msra.mxu0 0.0
    %124 = vmatprep.subr.mxu0 0.0
    %125 = vmatpush1.msra.mxu0 0.0
    %126 = vmatprep.subr.mxu0 0.0
    %127 = vmatpush1.msra.mxu0 0.0
    %128 = vmatprep.subr.mxu0 0.0
    %129 = vmatpush1.msra.mxu0 0.0
    %130 = vmatprep.mubr.f32.mxu0 0.0
    %131 = vmatmul.mubr.f32.gmra.mrb[0].mxu0 %v55
    %v132 = vpop.f32.mrb[0].mxu0
    %v133 = vadd.f32 0.0, %v132
    %v134 = vpop.f32.mrb[0].mxu0
    %135 = vmatprep.mubr.f32.mxu0 0.0
    %136 = vmatmul.mubr.f32.gmra.mrb[0].mxu0 %v58
    %v137 = vpop.f32.mrb[0].mxu0
    %v138 = vadd.f32 0.0, %v137
    %v139 = vpop.f32.mrb[0].mxu0
    %140 = vmatprep.mubr.f32.mxu0 0.0
    %141 = vmatmul.mubr.f32.gmra.mrb[0].mxu0 %v61
    %v142 = vpop.f32.mrb[0].mxu0
    %v143 = vadd.f32 0.0, %v142
    %v144 = vpop.f32.mrb[0].mxu0
    %145 = vmatprep.mubr.f32.mxu0 0.0
    %146 = vmatmul.mubr.f32.gmra.mrb[0].mxu0 %v64
    %v147 = vpop.f32.mrb[0].mxu0
    %v148 = vadd.f32 0.0, %v147
    %v149 = vpop.f32.mrb[0].mxu0
    %150 = vdwg.mxu0
    %vm151 = vcmask 261120
    %v153 = vsel %vm151, %v45, 0
    %v156 = vsel %vm151, %v46, 0
    %v159 = vsel %vm151, %v47, 0
    %v162 = vsel %vm151, %v48, 0
    %164 = vmatprep.subr.mxu0 0.0
    %165 = vmatpush1.msra.mxu0 %v40
    %166 = vmatprep.subr.mxu0 0.0
    %167 = vmatpush1.msra.mxu0 %v41
    %168 = vmatprep.subr.mxu0 0.0
    %169 = vmatpush1.msra.mxu0 %v42
    %170 = vmatprep.subr.mxu0 0.0
    %171 = vmatpush1.msra.mxu0 %v43
    %172 = vmatprep.subr.mxu0 0.0
    %173 = vmatpush1.msra.mxu0 0.0
    %174 = vmatprep.subr.mxu0 0.0
    %175 = vmatpush1.msra.mxu0 0.0
    %176 = vmatprep.subr.mxu0 0.0
    %177 = vmatpush1.msra.mxu0 0.0
    %178 = vmatprep.subr.mxu0 0.0
    %179 = vmatpush1.msra.mxu0 0.0
    %180 = vmatprep.subr.mxu0 0.0
    %181 = vmatpush1.msra.mxu0 0.0
    %182 = vmatprep.subr.mxu0 0.0
    %183 = vmatpush1.msra.mxu0 0.0
    %184 = vmatprep.subr.mxu0 0.0
    %185 = vmatpush1.msra.mxu0 0.0
    %186 = vmatprep.subr.mxu0 0.0
    %187 = vmatpush1.msra.mxu0 0.0
    %188 = vmatprep.subr.mxu0 0.0
    %189 = vmatpush1.msra.mxu0 0.0
    %190 = vmatprep.subr.mxu0 0.0
    %191 = vmatpush1.msra.mxu0 0.0
    %192 = vmatprep.subr.mxu0 0.0
    %193 = vmatpush1.msra.mxu0 0.0
    %194 = vmatprep.subr.mxu0 0.0
    %195 = vmatpush1.msra.mxu0 0.0
    %196 = vmatprep.subr.mxu0 0.0
    %197 = vmatpush1.msra.mxu0 0.0
    %198 = vmatprep.subr.mxu0 0.0
    %199 = vmatpush1.msra.mxu0 0.0
    %200 = vmatprep.subr.mxu0 0.0
    %201 = vmatpush1.msra.mxu0 0.0
    %202 = vmatprep.subr.mxu0 0.0
    %203 = vmatpush1.msra.mxu0 0.0
    %204 = vmatprep.subr.mxu0 0.0
    %205 = vmatpush1.msra.mxu0 0.0
    %206 = vmatprep.subr.mxu0 0.0
    %207 = vmatpush1.msra.mxu0 0.0
    %208 = vmatprep.subr.mxu0 0.0
    %209 = vmatpush1.msra.mxu0 0.0
    %210 = vmatprep.subr.mxu0 0.0
    %211 = vmatpush1.msra.mxu0 0.0
    %212 = vmatprep.subr.mxu0 0.0
    %213 = vmatpush1.msra.mxu0 0.0
    %214 = vmatprep.subr.mxu0 0.0
    %215 = vmatpush1.msra.mxu0 0.0
    %216 = vmatprep.subr.mxu0 0.0
    %217 = vmatpush1.msra.mxu0 0.0
    %218 = vmatprep.subr.mxu0 0.0
    %219 = vmatpush1.msra.mxu0 0.0
    %220 = vmatprep.subr.mxu0 0.0
    %221 = vmatpush1.msra.mxu0 0.0
    %222 = vmatprep.subr.mxu0 0.0
    %223 = vmatpush1.msra.mxu0 0.0
    %224 = vmatprep.subr.mxu0 0.0
    %225 = vmatpush1.msra.mxu0 0.0
    %226 = vmatprep.subr.mxu0 0.0
    %227 = vmatpush1.msra.mxu0 0.0
    %228 = vmatprep.mubr.f32.mxu0 0.0
    %229 = vmatmul.mubr.f32.gmra.mrb[0].mxu0 %v153
    %v230 = vpop.f32.mrb[0].mxu0
    %v231 = vadd.f32 %v133, %v230
    %v232 = vpop.f32.mrb[0].mxu0
    %233 = vmatprep.mubr.f32.mxu0 0.0
    %234 = vmatmul.mubr.f32.gmra.mrb[0].mxu0 %v156
    %v235 = vpop.f32.mrb[0].mxu0
    %v236 = vadd.f32 %v138, %v235
    %v237 = vpop.f32.mrb[0].mxu0
    %238 = vmatprep.mubr.f32.mxu0 0.0
    %239 = vmatmul.mubr.f32.gmra.mrb[0].mxu0 %v159
    %v240 = vpop.f32.mrb[0].mxu0
    %v241 = vadd.f32 %v143, %v240
    %v242 = vpop.f32.mrb[0].mxu0
    %243 = vmatprep.mubr.f32.mxu0 0.0
    %244 = vmatmul.mubr.f32.gmra.mrb[0].mxu0 %v162
    %v245 = vpop.f32.mrb[0].mxu0
    %v246 = vadd.f32 %v148, %v245
    %v247 = vpop.f32.mrb[0].mxu0
    %248 = vdwg.mxu0
    %v249 = vld [vmem:[%s4] sm:$0xff]
    %v250 = vld [vmem:[%s4 + $0x8] sm:$0xff]
    %v251 = vld [vmem:[%s4 + $0x10] sm:$0xff]
    %v252 = vld [vmem:[%s4 + $0x18] sm:$0xff]
    %254 = vset.pattern.permute.xlu0 0
    %255 = vperm.xlu0 %254, %v249
    %v256 = vpop.permute.xlu0 %255
    %259 = vset.pattern.permute.xlu0 0
    %260 = vperm.xlu0 %259, %v250
    %v261 = vpop.permute.xlu0 %260
    %264 = vset.pattern.permute.xlu0 0
    %265 = vperm.xlu0 %264, %v251
    %v266 = vpop.permute.xlu0 %265
    %269 = vset.pattern.permute.xlu0 0
    %270 = vperm.xlu0 %269, %v252
    %v271 = vpop.permute.xlu0 %270
    %v273 = vadd.f32 %v231, %v256
    %v274 = vadd.f32 %v236, %v261
    %v275 = vadd.f32 %v241, %v266
    %v276 = vadd.f32 %v246, %v271
    %v277 = vadd.f32 %v273, %v274
    %v278 = vadd.f32 %v277, %v275
    %v279 = vadd.f32 %v278, %v276
    %v280 = vrot.slane %v279, 4
    %v281 = vadd.f32 %v279, %v280
    %v282 = vrot.slane %v281, 2
    %v283 = vadd.f32 %v281, %v282
    %v284 = vrot.slane %v283, 1
    %v285 = vadd.f32 %v283, %v284
    %v286 = vmul.f32 %v285, 0.03125
    %v287 = vsub.f32 %v273, %v286
    %v288 = vsub.f32 %v274, %v286
    %v289 = vsub.f32 %v275, %v286
    %v290 = vsub.f32 %v276, %v286
    %v291 = vmul.f32 %v287, %v287
    %v292 = vmul.f32 %v288, %v288
    %v293 = vmul.f32 %v289, %v289
    %v294 = vmul.f32 %v290, %v290
    %v295 = vadd.f32 %v291, %v292
    %v296 = vadd.f32 %v295, %v293
    %v297 = vadd.f32 %v296, %v294
    %v298 = vrot.slane %v297, 4
    %v299 = vadd.f32 %v297, %v298
    %v300 = vrot.slane %v299, 2
    %v301 = vadd.f32 %v299, %v300
    %v302 = vrot.slane %v301, 1
    %v303 = vadd.f32 %v301, %v302
    %v304 = vmul.f32 %v303, 0.03125
    %v305 = vadd.f32 %v304, 1e-05
    %v306 = vrsqrt.pop %v305
    %v307 = vmul.f32 %v287, %v306
    %v308 = vmul.f32 %v288, %v306
    %v309 = vmul.f32 %v289, %v306
    %v310 = vmul.f32 %v290, %v306
    %v311 = vld [vmem:[%s5] sm:$0xff]
    %v312 = vld [vmem:[%s5 + $0x8] sm:$0xff]
    %v313 = vld [vmem:[%s5 + $0x10] sm:$0xff]
    %v314 = vld [vmem:[%s5 + $0x18] sm:$0xff]
    %316 = vset.pattern.permute.xlu0 0
    %317 = vperm.xlu0 %316, %v311
    %v318 = vpop.permute.xlu0 %317
    %321 = vset.pattern.permute.xlu0 0
    %322 = vperm.xlu0 %321, %v312
    %v323 = vpop.permute.xlu0 %322
    %326 = vset.pattern.permute.xlu0 0
    %327 = vperm.xlu0 %326, %v313
    %v328 = vpop.permute.xlu0 %327
    %331 = vset.pattern.permute.xlu0 0
    %332 = vperm.xlu0 %331, %v314
    %v333 = vpop.permute.xlu0 %332
    %v335 = vmul.f32 %v307, %v318
    %v336 = vmul.f32 %v308, %v323
    %v337 = vmul.f32 %v309, %v328
    %v338 = vmul.f32 %v310, %v333
    %v339 = vld [vmem:[%s6] sm:$0xff]
    %v340 = vld [vmem:[%s6 + $0x8] sm:$0xff]
    %v341 = vld [vmem:[%s6 + $0x10] sm:$0xff]
    %v342 = vld [vmem:[%s6 + $0x18] sm:$0xff]
    %344 = vset.pattern.permute.xlu0 0
    %345 = vperm.xlu0 %344, %v339
    %v346 = vpop.permute.xlu0 %345
    %349 = vset.pattern.permute.xlu0 0
    %350 = vperm.xlu0 %349, %v340
    %v351 = vpop.permute.xlu0 %350
    %354 = vset.pattern.permute.xlu0 0
    %355 = vperm.xlu0 %354, %v341
    %v356 = vpop.permute.xlu0 %355
    %359 = vset.pattern.permute.xlu0 0
    %360 = vperm.xlu0 %359, %v342
    %v361 = vpop.permute.xlu0 %360
    %v363 = vadd.f32 %v335, %v346
    %v364 = vadd.f32 %v336, %v351
    %v365 = vadd.f32 %v337, %v356
    %v366 = vadd.f32 %v338, %v361
    %v367 = vtanh.pop %v363
    %v368 = vtanh.pop %v364
    %v369 = vtanh.pop %v365
    %v370 = vtanh.pop %v366
    %v371 = vld [vmem:[%s7] sm:$0xff]
    %v372 = vld [vmem:[%s7 + $0x8] sm:$0xff]
    %v373 = vld [vmem:[%s7 + $0x10] sm:$0xff]
    %v374 = vld [vmem:[%s7 + $0x18] sm:$0xff]
    %v375 = vld [vmem:[%s8] sm:$0xff]
    %v376 = vld [vmem:[%s8 + $0x8] sm:$0xff]
    %v377 = vld [vmem:[%s8 + $0x10] sm:$0xff]
    %v378 = vld [vmem:[%s8 + $0x18] sm:$0xff]
    %380 = vset.pattern.permute.xlu0 0
    %381 = vperm.xlu0 %380, %v375
    %v382 = vpop.permute.xlu0 %381
    %385 = vset.pattern.permute.xlu0 0
    %386 = vperm.xlu0 %385, %v376
    %v387 = vpop.permute.xlu0 %386
    %390 = vset.pattern.permute.xlu0 0
    %391 = vperm.xlu0 %390, %v377
    %v392 = vpop.permute.xlu0 %391
    %395 = vset.pattern.permute.xlu0 0
    %396 = vperm.xlu0 %395, %v378
    %v397 = vpop.permute.xlu0 %396
    %v400 = vsel %vm151, %v371, 0
    %v403 = vsel %vm151, %v372, 0
    %v406 = vsel %vm151, %v373, 0
    %v409 = vsel %vm151, %v374, 0
    %411 = vmatprep.subr.mxu0 0.0
    %412 = vmatpush1.msra.mxu0 %v367
    %413 = vmatprep.subr.mxu0 0.0
    %414 = vmatpush1.msra.mxu0 %v368
    %415 = vmatprep.subr.mxu0 0.0
    %416 = vmatpush1.msra.mxu0 %v369
    %417 = vmatprep.subr.mxu0 0.0
    %418 = vmatpush1.msra.mxu0 %v370
    %419 = vmatprep.subr.mxu0 0.0
    %420 = vmatpush1.msra.mxu0 0.0
    %421 = vmatprep.subr.mxu0 0.0
    %422 = vmatpush1.msra.mxu0 0.0
    %423 = vmatprep.subr.mxu0 0.0
    %424 = vmatpush1.msra.mxu0 0.0
    %425 = vmatprep.subr.mxu0 0.0
    %426 = vmatpush1.msra.mxu0 0.0
    %427 = vmatprep.subr.mxu0 0.0
    %428 = vmatpush1.msra.mxu0 0.0
    %429 = vmatprep.subr.mxu0 0.0
    %430 = vmatpush1.msra.mxu0 0.0
    %431 = vmatprep.subr.mxu0 0.0
    %432 = vmatpush1.msra.mxu0 0.0
    %433 = vmatprep.subr.mxu0 0.0
    %434 = vmatpush1.msra.mxu0 0.0
    %435 = vmatprep.subr.mxu0 0.0
    %436 = vmatpush1.msra.mxu0 0.0
    %437 = vmatprep.subr.mxu0 0.0
    %438 = vmatpush1.msra.mxu0 0.0
    %439 = vmatprep.subr.mxu0 0.0
    %440 = vmatpush1.msra.mxu0 0.0
    %441 = vmatprep.subr.mxu0 0.0
    %442 = vmatpush1.msra.mxu0 0.0
    %443 = vmatprep.subr.mxu0 0.0
    %444 = vmatpush1.msra.mxu0 0.0
    %445 = vmatprep.subr.mxu0 0.0
    %446 = vmatpush1.msra.mxu0 0.0
    %447 = vmatprep.subr.mxu0 0.0
    %448 = vmatpush1.msra.mxu0 0.0
    %449 = vmatprep.subr.mxu0 0.0
    %450 = vmatpush1.msra.mxu0 0.0
    %451 = vmatprep.subr.mxu0 0.0
    %452 = vmatpush1.msra.mxu0 0.0
    %453 = vmatprep.subr.mxu0 0.0
    %454 = vmatpush1.msra.mxu0 0.0
    %455 = vmatprep.subr.mxu0 0.0
    %456 = vmatpush1.msra.mxu0 0.0
    %457 = vmatprep.subr.mxu0 0.0
    %458 = vmatpush1.msra.mxu0 0.0
    %459 = vmatprep.subr.mxu0 0.0
    %460 = vmatpush1.msra.mxu0 0.0
    %461 = vmatprep.subr.mxu0 0.0
    %462 = vmatpush1.msra.mxu0 0.0
    %463 = vmatprep.subr.mxu0 0.0
    %464 = vmatpush1.msra.mxu0 0.0
    %465 = vmatprep.subr.mxu0 0.0
    %466 = vmatpush1.msra.mxu0 0.0
    %467 = vmatprep.subr.mxu0 0.0
    %468 = vmatpush1.msra.mxu0 0.0
    %469 = vmatprep.subr.mxu0 0.0
    %470 = vmatpush1.msra.mxu0 0.0
    %471 = vmatprep.subr.mxu0 0.0
    %472 = vmatpush1.msra.mxu0 0.0
    %473 = vmatprep.subr.mxu0 0.0
    %474 = vmatpush1.msra.mxu0 0.0
    %475 = vmatprep.mubr.f32.mxu0 0.0
    %476 = vmatmul.mubr.f32.gmra.mrb[0].mxu0 %v400
    %v477 = vpop.f32.mrb[0].mxu0
    %v478 = vadd.f32 %v382, %v477
    %v479 = vpop.f32.mrb[0].mxu0
    %480 = vmatprep.mubr.f32.mxu0 0.0
    %481 = vmatmul.mubr.f32.gmra.mrb[0].mxu0 %v403
    %v482 = vpop.f32.mrb[0].mxu0
    %v483 = vadd.f32 %v387, %v482
    %v484 = vpop.f32.mrb[0].mxu0
    %485 = vmatprep.mubr.f32.mxu0 0.0
    %486 = vmatmul.mubr.f32.gmra.mrb[0].mxu0 %v406
    %v487 = vpop.f32.mrb[0].mxu0
    %v488 = vadd.f32 %v392, %v487
    %v489 = vpop.f32.mrb[0].mxu0
    %490 = vmatprep.mubr.f32.mxu0 0.0
    %491 = vmatmul.mubr.f32.gmra.mrb[0].mxu0 %v409
    %v492 = vpop.f32.mrb[0].mxu0
    %v493 = vadd.f32 %v397, %v492
    %v494 = vpop.f32.mrb[0].mxu0
    %495 = vdwg.mxu0
    %vm496 = vcmp.gt.f32.partialorder %v478, 0.0
    %vm497 = vcmp.gt.f32.partialorder %v483, 0.0
    %vm498 = vcmp.gt.f32.partialorder %v488, 0.0
    %vm499 = vcmp.gt.f32.partialorder %v493, 0.0
    %v500 = vmin.f32 %v478, 0.0
    %v501 = vmin.f32 %v483, 0.0
    %v502 = vmin.f32 %v488, 0.0
    %v503 = vmin.f32 %v493, 0.0
    %v504 = vmul.f32 %v500, 1.442695
    %v505 = vpow.pop %v504
    %v506 = vmul.f32 %v501, 1.442695
    %v507 = vpow.pop %v506
    %v508 = vmul.f32 %v502, 1.442695
    %v509 = vpow.pop %v508
    %v510 = vmul.f32 %v503, 1.442695
    %v511 = vpow.pop %v510
    %v512 = vsub.f32 %v505, 1.0
    %v513 = vsub.f32 %v507, 1.0
    %v514 = vsub.f32 %v509, 1.0
    %v515 = vsub.f32 %v511, 1.0
    %v516 = vsel %vm496, %v478, %v512
    %v517 = vsel %vm497, %v483, %v513
    %v518 = vsel %vm498, %v488, %v514
    %v519 = vsel %vm499, %v493, %v515
    %v520 = vld [vmem:[%s9] sm:$0x1]
    %s521 = sld [smem:[#allocation2]]
    %v522 = vstv %s521
    %v524 = vsel %vm151, %v520, 0
    %526 = vmatprep.subr.mxu0 0.0
    %527 = vmatpush1.msra.mxu0 %v516
    %528 = vmatprep.subr.mxu0 0.0
    %529 = vmatpush1.msra.mxu0 %v517
    %530 = vmatprep.subr.mxu0 0.0
    %531 = vmatpush1.msra.mxu0 %v518
    %532 = vmatprep.subr.mxu0 0.0
    %533 = vmatpush1.msra.mxu0 %v519
    %534 = vmatprep.subr.mxu0 0.0
    %535 = vmatpush1.msra.mxu0 0.0
    %536 = vmatprep.subr.mxu0 0.0
    %537 = vmatpush1.msra.mxu0 0.0
    %538 = vmatprep.subr.mxu0 0.0
    %539 = vmatpush1.msra.mxu0 0.0
    %540 = vmatprep.subr.mxu0 0.0
    %541 = vmatpush1.msra.mxu0 0.0
    %542 = vmatprep.subr.mxu0 0.0
    %543 = vmatpush1.msra.mxu0 0.0
    %544 = vmatprep.subr.mxu0 0.0
    %545 = vmatpush1.msra.mxu0 0.0
    %546 = vmatprep.subr.mxu0 0.0
    %547 = vmatpush1.msra.mxu0 0.0
    %548 = vmatprep.subr.mxu0 0.0
    %549 = vmatpush1.msra.mxu0 0.0
    %550 = vmatprep.subr.mxu0 0.0
    %551 = vmatpush1.msra.mxu0 0.0
    %552 = vmatprep.subr.mxu0 0.0
    %553 = vmatpush1.msra.mxu0 0.0
    %554 = vmatprep.subr.mxu0 0.0
    %555 = vmatpush1.msra.mxu0 0.0
    %556 = vmatprep.subr.mxu0 0.0
    %557 = vmatpush1.msra.mxu0 0.0
    %558 = vmatprep.subr.mxu0 0.0
    %559 = vmatpush1.msra.mxu0 0.0
    %560 = vmatprep.subr.mxu0 0.0
    %561 = vmatpush1.msra.mxu0 0.0
    %562 = vmatprep.subr.mxu0 0.0
    %563 = vmatpush1.msra.mxu0 0.0
    %564 = vmatprep.subr.mxu0 0.0
    %565 = vmatpush1.msra.mxu0 0.0
    %566 = vmatprep.subr.mxu0 0.0
    %567 = vmatpush1.msra.mxu0 0.0
    %568 = vmatprep.subr.mxu0 0.0
    %569 = vmatpush1.msra.mxu0 0.0
    %570 = vmatprep.subr.mxu0 0.0
    %571 = vmatpush1.msra.mxu0 0.0
    %572 = vmatprep.subr.mxu0 0.0
    %573 = vmatpush1.msra.mxu0 0.0
    %574 = vmatprep.subr.mxu0 0.0
    %575 = vmatpush1.msra.mxu0 0.0
    %576 = vmatprep.subr.mxu0 0.0
    %577 = vmatpush1.msra.mxu0 0.0
    %578 = vmatprep.subr.mxu0 0.0
    %579 = vmatpush1.msra.mxu0 0.0
    %580 = vmatprep.subr.mxu0 0.0
    %581 = vmatpush1.msra.mxu0 0.0
    %582 = vmatprep.subr.mxu0 0.0
    %583 = vmatpush1.msra.mxu0 0.0
    %584 = vmatprep.subr.mxu0 0.0
    %585 = vmatpush1.msra.mxu0 0.0
    %586 = vmatprep.subr.mxu0 0.0
    %587 = vmatpush1.msra.mxu0 0.0
    %588 = vmatprep.subr.mxu0 0.0
    %589 = vmatpush1.msra.mxu0 0.0
    %590 = vmatprep.mubr.f32.mxu0 0.0
    %591 = vmatmul.mubr.f32.gmra.mrb[0].mxu0 %v524
    %v592 = vpop.f32.mrb[0].mxu0
    %v593 = vadd.f32 %v522, %v592
    %v594 = vpop.f32.mrb[0].mxu0
    %595 = vdwg.mxu0
    %596 = vst [vmem:[#allocation3] sm:$0x1] %v593
    // Predicated region
    $region46: #{tpu_custom_call.1} parent=1 // pred_check
      _
    $region47: #{tpu_custom_call.1} parent=1 // pred_check_branch
      %598 = sbr.rel (0) target = $region49
    $region48: #{tpu_custom_call.1} parent=1 // pred_region
      %s600 = ssub.s32 16, 16
      %601 = vsyncadd [#allocation4], %s600
      %s603 = sshll.u32 [#allocation3], 4
      %s604 = int_to_ptr.vmem [resolvable:$true] %s603
      %606 = dma.vmem_to_hbm [thread:$0]  %s604, 16, %s11, [#allocation4]
    $region49: #{tpu_custom_call.1} parent=1 // pred_fallthru
      _
    // Predicated region
    $region50: #{tpu_custom_call.1} parent=1 // pred_check
      _
    $region51: #{tpu_custom_call.1} parent=1 // pred_check_branch
      %608 = sbr.rel (0) target = $region53
    $region52: #{tpu_custom_call.1} parent=1 // pred_region
      %609 = dma.done [#allocation4], 16
    $region53: #{tpu_custom_call.1} parent=1 // pred_fallthru
      _
    %610 = vsyncpa [#allocation4], 1

</llo_original>
